<compile_context>
chip_gen: v7x
topology: tpu7x:2x2x1
jax: 0.10.0
libtpu: 0.0.40
codegen_flags: <defaults>
</compile_context>

<pallas_src>
import math

import jax
import jax.numpy as jnp
from jax.experimental import pallas as pl
from jax.experimental.pallas import tpu as pltpu


def _round_up(x, m):
    return ((x + m - 1) // m) * m


def _cdiv(a, b):
    return -(-a // b)


# --------------------------------------------------------------------------- #
# Kernel
# --------------------------------------------------------------------------- #
def ffn_kernel(x_ref, w1_ref, b1_ref, w2_ref, b2_ref, o_ref, acc_ref):
    """One (token-tile i, pf-tile p) grid step.

    x_ref:   (tm, H)  compute-dtype token tile      (resident across p)
    w1_ref:  (H, tp)  linear1 weight slice
    b1_ref:  (1, tp)  linear1 bias slice (f32)
    w2_ref:  (tp, H)  linear2 weight slice
    b2_ref:  (1, H)   linear2 bias (f32)
    o_ref:   (tm, H)  output tile                    (resident across p)
    acc_ref: (tm, H)  f32 accumulator scratch        (resident across p)
    """
    p = pl.program_id(1)

    @pl.when(p == 0)
    def _init():
        acc_ref[...] = jnp.zeros_like(acc_ref)

    # linear1 tile on the MXU (f32 accumulate); bias + ReLU in f32 on the VPU.
    h = jnp.dot(x_ref[...], w1_ref[...], preferred_element_type=jnp.float32)
    h = jnp.maximum(h + b1_ref[...], 0.0)
    # dropout: identity (inference mode).
    # TODO(synk): training-mode dropout via pltpu.prng_seed / prng_random_bits.

    # linear2 tile, accumulated in f32; ReLU output recast for the MXU.
    acc_ref[...] += jnp.dot(h.astype(w2_ref.dtype), w2_ref[...],
                            preferred_element_type=jnp.float32)

    @pl.when(p == pl.num_programs(1) - 1)
    def _finalize():
        o_ref[...] = (acc_ref[...] + b2_ref[...]).astype(o_ref.dtype)


# --------------------------------------------------------------------------- #
# Tiling selection
# --------------------------------------------------------------------------- #
def _vmem_capacity_bytes():
    try:
        return int(pltpu.get_tpu_info().vmem_capacity_bytes)
    except Exception:
        return 64 << 20  # conservative fallback: v7x physical VMEM per TC


def _vmem_est(tm, tp, H, cdt_bytes, out_bytes, w_bufs=2):
    """Rough per-kernel VMEM footprint for a (tm, tp) tiling."""
    return (2 * tm * H * cdt_bytes                 # x tiles (double-buffered)
            + 2 * tm * H * out_bytes               # out tiles (double-buffered)
            + w_bufs * 2 * H * tp * cdt_bytes      # w1 + w2 tiles
            + 4 * (max(tp, 128) + max(H, 128)) * 4  # bias tiles (f32, padded)
            + tm * H * 4                           # f32 accumulator scratch
            + tm * tp * (4 + cdt_bytes))           # h intermediate + recast copy


def _select_tiling(M, H, P_pad, cdt_bytes, out_bytes):
    """Pick (tm, tp) maximizing weight amortization under the VMEM budget.

    tm sets the arithmetic intensity w.r.t. streamed weights (~tm FLOP/byte);
    tp only sets the per-step weight-tile footprint.  A weight-resident
    tp == P_pad makes the w1/w2 block indices constant, so Pallas fetches the
    weights from HBM exactly once per call regardless of M.
    """
    vmem_cap = _vmem_capacity_bytes()
    budget = int(vmem_cap * 0.78)  # headroom for compiler-internal scratch

    m_cap = _round_up(max(M, 8), 8)
    tm_cands = [t for t in (1024, 768, 512, 384, 256, 192, 128, 64, 32, 16, 8)
                if t <= m_cap] or [m_cap]
    # tp: multiples of 128 that divide P_pad (keeps the p axis pipelined with
    # lane-aligned, non-ragged tiles), largest first.
    tp_cands = [d for d in range(P_pad, 0, -128) if P_pad % d == 0] or [P_pad]

    best = None
    for tm in tm_cands:
        for tp in tp_cands:
            if _vmem_est(tm, tp, H, cdt_bytes, out_bytes) > budget:
                continue
            streams = 1 if tp == P_pad else _cdiv(M, tm)
            # fewer weight re-streams first, then bigger token tile, then tp.
            key = (-streams, tm, tp)
            if best is None or key > best[0]:
                best = (key, tm, tp)
    if best is None:
        tm, tp = tm_cands[-1], tp_cands[-1]  # degenerate fallback: tiny tiles
    else:
        _, tm, tp = best
    return tm, tp, budget, vmem_cap


# --------------------------------------------------------------------------- #
# Host-side wrappers
# --------------------------------------------------------------------------- #
def prepare_ffn_params(w1, b1, w2, b2, compute_dtype=jnp.bfloat16):
    """One-time parameter prep (hoisted out of the per-call path).

    * Weights are stored as [in, out] (transposed w.r.t. PyTorch nn.Linear)
      and cast to the MXU compute dtype once, so each call does not re-read
      and re-write the f32 weights in HBM.
    * P is zero-padded to a multiple of 128 so the pf axis always tiles into
      lane-aligned blocks.  Padded columns give relu(0 + 0) = 0 and hit zero
      rows of w2, so the output is bit-identical to the unpadded math.
    Pass compute_dtype=jnp.float32 for an exact (slower) f32 MXU path.
    """
    cdt = jnp.dtype(compute_dtype)
    H, P = w1.shape
    P_pad = _round_up(P, 128)
    if P_pad != P:
        w1 = jnp.pad(w1, ((0, 0), (0, P_pad - P)))
        b1 = jnp.pad(b1, (0, P_pad - P))
        w2 = jnp.pad(w2, ((0, P_pad - P), (0, 0)))
    return (w1.astype(cdt),
            b1.reshape(1, P_pad).astype(jnp.float32),
            w2.astype(cdt),
            b2.reshape(1, H).astype(jnp.float32))


def positionwise_ffn(x, params):
    """x: [..., H] -> [..., H]; params from prepare_ffn_params()."""
    w1c, b1_2, w2c, b2_2 = params
    H, P_pad = w1c.shape
    assert x.shape[-1] == H, "hidden dim mismatch"

    lead = x.shape[:-1]
    M = math.prod(lead) if lead else 1
    cdt = w1c.dtype
    out_dtype = x.dtype
    cdt_bytes = jnp.dtype(cdt).itemsize
    out_bytes = jnp.dtype(out_dtype).itemsize

    tm, tp, budget, vmem_cap = _select_tiling(M, H, P_pad, cdt_bytes, out_bytes)
    M_pad = _round_up(M, tm)

    x2 = x.reshape(M, H).astype(cdt)
    if M_pad != M:
        x2 = jnp.pad(x2, ((0, M_pad - M), (0, 0)))  # padded rows sliced off below

    grid = (M_pad // tm, P_pad // tp)
    weight_streams = 1 if tp == P_pad else grid[0]

    # Advisory cost for XLA: count the real weight re-streaming of this tiling.
    flops = 4 * M * H * P_pad  # two GEMMs, 2*M*H*P each
    bytes_accessed = (M_pad * H * (cdt_bytes + out_bytes)
                      + weight_streams * 2 * H * P_pad * cdt_bytes
                      + (P_pad + H) * 4)
    cost = pl.CostEstimate(flops=int(flops), transcendentals=0,
                           bytes_accessed=int(bytes_accessed))

    # Deeper weight buffering hides DMA jitter on the inner (reduction) axis,
    # but only when weights are actually re-streamed and VMEM allows it.
    deep_w = (tp < P_pad and
              _vmem_est(tm, tp, H, cdt_bytes, out_bytes, w_bufs=3) <= budget)
    if deep_w:
        vmem_est = _vmem_est(tm, tp, H, cdt_bytes, out_bytes, w_bufs=3)
        w1_spec = pl.BlockSpec((H, tp), lambda i, p: (0, p),
                               pipeline_mode=pl.Buffered(3))
        w2_spec = pl.BlockSpec((tp, H), lambda i, p: (p, 0),
                               pipeline_mode=pl.Buffered(3))
    else:
        vmem_est = _vmem_est(tm, tp, H, cdt_bytes, out_bytes)
        w1_spec = pl.BlockSpec((H, tp), lambda i, p: (0, p))
        w2_spec = pl.BlockSpec((tp, H), lambda i, p: (p, 0))

    # Never below the actual requirement, never above physical VMEM.
    vmem_limit = int(min(max(int(vmem_est * 1.25), 32 << 20), vmem_cap))

    out2 = pl.pallas_call(
        ffn_kernel,
        out_shape=jax.ShapeDtypeStruct((M_pad, H), out_dtype),
        grid_spec=pltpu.PrefetchScalarGridSpec(
            num_scalar_prefetch=0,
            grid=grid,
            in_specs=[
                pl.BlockSpec((tm, H), lambda i, p: (i, 0)),   # x tile (resident in p)
                w1_spec,                                       # w1 slice
                pl.BlockSpec((1, tp), lambda i, p: (0, p)),    # b1 slice
                w2_spec,                                       # w2 slice
                pl.BlockSpec((1, H), lambda i, p: (0, 0)),     # b2
            ],
            out_specs=pl.BlockSpec((tm, H), lambda i, p: (i, 0)),
            scratch_shapes=[pltpu.VMEM((tm, H), jnp.float32)],
        ),
        compiler_params=pltpu.CompilerParams(
            dimension_semantics=("parallel", "arbitrary"),
            vmem_limit_bytes=vmem_limit),
        cost_estimate=cost,
    )(x2, w1c, b1_2, w2c, b2_2)

    return out2[:M].reshape(*lead, H)


# --------------------------------------------------------------------------- #
# Smoke test
# --------------------------------------------------------------------------- #
def _init_linear_params(key, in_dim, out_dim, dtype=jnp.float32):
    """Matches nn.Linear's U(-1/sqrt(in), 1/sqrt(in)); stored as [in, out]."""
    kw, kb = jax.random.split(key)
    bound = 1.0 / math.sqrt(in_dim)
    w = jax.random.uniform(kw, (in_dim, out_dim), dtype, -bound, bound)
    b = jax.random.uniform(kb, (out_dim,), dtype, -bound, bound)
    return w, b


if __name__ == "__main__":
    hid_dim, pf_dim = 32, 64
    batch, seq = 2, 8

    root = jax.random.PRNGKey(0)
    kx, k1, k2 = jax.random.split(root, 3)

    x = jax.random.normal(kx, (batch, seq, hid_dim), jnp.float32)
    w1, b1 = _init_linear_params(k1, hid_dim, pf_dim)
    w2, b2 = _init_linear_params(k2, pf_dim, hid_dim)

    params = prepare_ffn_params(w1, b1, w2, b2)   # cast + pad ONCE, not per call
    ffn = jax.jit(positionwise_ffn)

    y = jax.block_until_ready(ffn(x, params))
    assert y.shape == x.shape and y.dtype == x.dtype

    # Reference in plain JAX with the same bf16-in / f32-accumulate arithmetic.
    xb = x.reshape(-1, hid_dim).astype(jnp.bfloat16)
    h_ref = jnp.maximum(
        jnp.dot(xb, w1.astype(jnp.bfloat16),
                preferred_element_type=jnp.float32) + b1, 0.0)
    ref = jnp.dot(h_ref.astype(jnp.bfloat16), w2.astype(jnp.bfloat16),
                  preferred_element_type=jnp.float32) + b2
    ref = ref.reshape(batch, seq, hid_dim).astype(x.dtype)

    assert jnp.allclose(y, ref, atol=5e-3, rtol=5e-3), "mismatch vs reference"

    print("KERNEL_OK")
</pallas_src>

<mosaic_0001>
module attributes {stable_mosaic.version = 11 : i64} {
  func.func @ffn_kernel(%arg0: i32, %arg1: i32, %arg2: memref<16x32xbf16, #tpu.memory_space<vmem>>, %arg3: memref<32x128xbf16, #tpu.memory_space<vmem>>, %arg4: memref<1x128xf32, #tpu.memory_space<vmem>>, %arg5: memref<128x32xbf16, #tpu.memory_space<vmem>>, %arg6: memref<1x32xf32, #tpu.memory_space<vmem>>, %arg7: memref<16x32xf32, #tpu.memory_space<vmem>>, %arg8: memref<16x32xf32, #tpu.memory_space<vmem>>) attributes {dimension_semantics = [#tpu.dimension_semantics<parallel>, #tpu.dimension_semantics<arbitrary>], iteration_bounds = array<i64: 1, 1>, scalar_prefetch = 0 : i64, scratch_operands = 1 : i64, tpu.core_type = #tpu.core_type<tc>, window_params = [{transform_indices = @transform_0, window_bounds = array<i64: 16, 32>}, {transform_indices = @transform_1, window_bounds = array<i64: 32, 128>}, {transform_indices = @transform_2, window_bounds = array<i64: 1, 128>}, {transform_indices = @transform_3, window_bounds = array<i64: 128, 32>}, {pipeline_mode = #tpu.pipeline_mode<synchronous>, transform_indices = @transform_4, window_bounds = array<i64: 1, 32>}, {transform_indices = @transform_5, window_bounds = array<i64: 16, 32>}]} {
    %c0_i32 = arith.constant 0 : i32
    %0 = arith.cmpi eq, %arg1, %c0_i32 : i32
    %1 = arith.extui %0 : i1 to i32
    %c0_i32_0 = arith.constant 0 : i32
    %2 = arith.cmpi ne, %1, %c0_i32_0 : i32
    scf.if %2 {
      %cst_16 = arith.constant 0.000000e+00 : f32
      %20 = vector.broadcast %cst_16 : f32 to vector<16x32xf32>
      %c0_17 = arith.constant 0 : index
      %c0_18 = arith.constant 0 : index
      %21 = vector.load %arg8[%c0_17, %c0_18] : memref<16x32xf32, #tpu.memory_space<vmem>>, vector<16x32xf32>
      tpu.vector_store %arg8[%c0_17, %c0_18], %20 {strides = array<i32>} : memref<16x32xf32, #tpu.memory_space<vmem>>, vector<16x32xf32>,
    } else {
    }
    %c0 = arith.constant 0 : index
    %c0_1 = arith.constant 0 : index
    %3 = vector.load %arg2[%c0, %c0_1] : memref<16x32xbf16, #tpu.memory_space<vmem>>, vector<16x32xbf16>
    %c0_2 = arith.constant 0 : index
    %c0_3 = arith.constant 0 : index
    %4 = vector.load %arg3[%c0_2, %c0_3] : memref<32x128xbf16, #tpu.memory_space<vmem>>, vector<32x128xbf16>
    %cst = arith.constant dense<0.000000e+00> : vector<16x128xf32>
    %5 = tpu.matmul %3, %4, %cst {dimension_numbers = #tpu.dot_dimension_numbers<[1], [0], [0], [1], [0, 0, 1, 1], [], []>} : vector<16x32xbf16>, vector<32x128xbf16>, vector<16x128xf32> -> vector<16x128xf32>
    %c0_4 = arith.constant 0 : index
    %c0_5 = arith.constant 0 : index
    %6 = vector.load %arg4[%c0_4, %c0_5] : memref<1x128xf32, #tpu.memory_space<vmem>>, vector<1x128xf32>
    %7 = vector.broadcast %6 : vector<1x128xf32> to vector<16x128xf32>
    %8 = arith.addf %5, %7 : vector<16x128xf32>
    %cst_6 = arith.constant 0.000000e+00 : f32
    %9 = vector.broadcast %cst_6 : f32 to vector<16x128xf32>
    %10 = arith.maximumf %8, %9 : vector<16x128xf32>
    %c0_7 = arith.constant 0 : index
    %c0_8 = arith.constant 0 : index
    %11 = vector.load %arg8[%c0_7, %c0_8] : memref<16x32xf32, #tpu.memory_space<vmem>>, vector<16x32xf32>
    %12 = arith.truncf %10 : vector<16x128xf32> to vector<16x128xbf16>
    %c0_9 = arith.constant 0 : index
    %c0_10 = arith.constant 0 : index
    %13 = vector.load %arg5[%c0_9, %c0_10] : memref<128x32xbf16, #tpu.memory_space<vmem>>, vector<128x32xbf16>
    %cst_11 = arith.constant dense<0.000000e+00> : vector<16x32xf32>
    %14 = tpu.matmul %12, %13, %cst_11 {dimension_numbers = #tpu.dot_dimension_numbers<[1], [0], [0], [1], [0, 0, 1, 1], [], []>} : vector<16x128xbf16>, vector<128x32xbf16>, vector<16x32xf32> -> vector<16x32xf32>
    %15 = arith.addf %11, %14 : vector<16x32xf32>
    %c0_12 = arith.constant 0 : index
    %c0_13 = arith.constant 0 : index
    %16 = vector.load %arg8[%c0_12, %c0_13] : memref<16x32xf32, #tpu.memory_space<vmem>>, vector<16x32xf32>
    tpu.vector_store %arg8[%c0_12, %c0_13], %15 {strides = array<i32>} : memref<16x32xf32, #tpu.memory_space<vmem>>, vector<16x32xf32>,
    %c0_i32_14 = arith.constant 0 : i32
    %17 = arith.cmpi eq, %arg1, %c0_i32_14 : i32
    %18 = arith.extui %17 : i1 to i32
    %c0_i32_15 = arith.constant 0 : i32
    %19 = arith.cmpi ne, %18, %c0_i32_15 : i32
    scf.if %19 {
      %c0_16 = arith.constant 0 : index
      %c0_17 = arith.constant 0 : index
      %20 = vector.load %arg8[%c0_16, %c0_17] : memref<16x32xf32, #tpu.memory_space<vmem>>, vector<16x32xf32>
      %c0_18 = arith.constant 0 : index
      %c0_19 = arith.constant 0 : index
      %21 = vector.load %arg6[%c0_18, %c0_19] : memref<1x32xf32, #tpu.memory_space<vmem>>, vector<1x32xf32>
      %22 = vector.broadcast %21 : vector<1x32xf32> to vector<16x32xf32>
      %23 = arith.addf %20, %22 : vector<16x32xf32>
      %c0_20 = arith.constant 0 : index
      %c0_21 = arith.constant 0 : index
      %24 = vector.load %arg7[%c0_20, %c0_21] : memref<16x32xf32, #tpu.memory_space<vmem>>, vector<16x32xf32>
      tpu.vector_store %arg7[%c0_20, %c0_21], %23 {strides = array<i32>} : memref<16x32xf32, #tpu.memory_space<vmem>>, vector<16x32xf32>,
    } else {
    }
    return
  }
  func.func @transform_0(%arg0: i32, %arg1: i32) -> (i32, i32) {
    %c0_i32 = arith.constant 0 : i32
    %c0_i32_0 = arith.constant 0 : i32
    return %arg0, %c0_i32 : i32, i32
  }
  func.func @transform_1(%arg0: i32, %arg1: i32) -> (i32, i32) {
    %c0_i32 = arith.constant 0 : i32
    %c0_i32_0 = arith.constant 0 : i32
    return %c0_i32, %arg1 : i32, i32
  }
  func.func @transform_2(%arg0: i32, %arg1: i32) -> (i32, i32) {
    %c0_i32 = arith.constant 0 : i32
    %c0_i32_0 = arith.constant 0 : i32
    return %c0_i32, %arg1 : i32, i32
  }
  func.func @transform_3(%arg0: i32, %arg1: i32) -> (i32, i32) {
    %c0_i32 = arith.constant 0 : i32
    %c0_i32_0 = arith.constant 0 : i32
    return %arg1, %c0_i32 : i32, i32
  }
  func.func @transform_4(%arg0: i32, %arg1: i32) -> (i32, i32) {
    %c0_i32 = arith.constant 0 : i32
    %c0_i32_0 = arith.constant 0 : i32
    %c0_i32_1 = arith.constant 0 : i32
    return %c0_i32, %c0_i32_0 : i32, i32
  }
  func.func @transform_5(%arg0: i32, %arg1: i32) -> (i32, i32) {
    %c0_i32 = arith.constant 0 : i32
    %c0_i32_0 = arith.constant 0 : i32
    return %arg0, %c0_i32 : i32, i32
  }
}

</mosaic_0001>

<llo_original>
// kernel: positionwise_ffn.1
$region0: #{positionwise_ffn.1}
  #allocation0 [shape = 'u32[]', space=smem, size = 0x4, offset = 0x4, fixed_abs, tag = 'smem constant byte address 0x4 - core index']
  #allocation1 [shape = 'u32[144,128]{1,0:T(1,128)}', space=vmem, size = 0x12000, scoped, tag = 'internal scratch']
  #allocation2 [shape = 'f32[16,32]{1,0:T(8,128)}', space=vmem, size = 0x2000, scoped, tag = 'scratch operand']
  %s0 = inlined_call_operand.vmem [shape: bf16[16,32], index: 0, kind: input, shape index: {}]
  %s1 = inlined_call_operand.vmem [shape: bf16[32,128], index: 1, kind: input, shape index: {}]
  %s2 = inlined_call_operand.vmem [shape: f32[1,128], index: 2, kind: input, shape index: {}]
  %s3 = inlined_call_operand.vmem [shape: bf16[128,32], index: 3, kind: input, shape index: {}]
  %s4 = inlined_call_operand.vmem [shape: f32[1,32], index: 4, kind: input, shape index: {}]
  %s5 = inlined_call_operand.hbm [shape: f32[16,32], index: 5, kind: output, shape index: {}]
  %s6 = sld [smem:[#allocation0]]
  $region38: #{positionwise_ffn.1} parent=0
    _
  %s8 = ssub.s32 1, %s6
  %s9 = scalar_select 0, %s8, %s6
  $region1: #{positionwise_ffn.1} parent=0
    #allocation3 [shape = 'u8[8192]{0}', space=vmem, size = 0x2000, scoped, tag = 'output window, operand 0, single buffered']
    #allocation4 [shape = 's32[1]{0}', space=sflag, size = 0x4, scoped, tag = 'scoped memory for positionwise_ffn.1']
    %10 = vsyncpa [#allocation4], 0
    // Predicated region
    $region2: #{positionwise_ffn.1} parent=1 // pred_check
      _
    $region3: #{positionwise_ffn.1} parent=1 // pred_check_branch
      %12 = sbr.rel (0) target = $region5
    $region4: #{positionwise_ffn.1} parent=1 // pred_region
      _
    $region5: #{positionwise_ffn.1} parent=1 // pred_fallthru
      _
    // Predicated region
    $region6: #{positionwise_ffn.1} parent=1 // pred_check
      _
    $region7: #{positionwise_ffn.1} parent=1 // pred_check_branch
      %14 = sbr.rel (0) target = $region9
    $region8: #{positionwise_ffn.1} parent=1 // pred_region
      _
    $region9: #{positionwise_ffn.1} parent=1 // pred_fallthru
      _
    // Predicated region
    $region10: #{positionwise_ffn.1} parent=1 // pred_check
      _
    $region11: #{positionwise_ffn.1} parent=1 // pred_check_branch
      %16 = sbr.rel (0) target = $region13
    $region12: #{positionwise_ffn.1} parent=1 // pred_region
      _
    $region13: #{positionwise_ffn.1} parent=1 // pred_fallthru
      _
    // Predicated region
    $region14: #{positionwise_ffn.1} parent=1 // pred_check
      _
    $region15: #{positionwise_ffn.1} parent=1 // pred_check_branch
      %18 = sbr.rel (0) target = $region17
    $region16: #{positionwise_ffn.1} parent=1 // pred_region
      _
    $region17: #{positionwise_ffn.1} parent=1 // pred_fallthru
      _
    // Predicated region
    $region18: #{positionwise_ffn.1} parent=1 // pred_check
      _
    $region19: #{positionwise_ffn.1} parent=1 // pred_check_branch
      %20 = sbr.rel (0) target = $region21
    $region20: #{positionwise_ffn.1} parent=1 // pred_region
      _
    $region21: #{positionwise_ffn.1} parent=1 // pred_fallthru
      _
    %p22 = scmp.eq.s32.totalorder 0, 0
    // Predicated region
    $region22: #{positionwise_ffn.1} parent=1 // pred_check
      %p23 = pneg %p22
    $region23: #{positionwise_ffn.1} parent=1 // pred_check_branch
      %25 = sbr.rel (%p23) target = $region25
    $region24: #{positionwise_ffn.1} parent=1 // pred_region
      %vm26 = vcmask 261120
      %27 = vst.msk [vmem:[#allocation2] sm:$0xff] %vm26, 0.0
      %28 = vst.msk [vmem:[#allocation2 + $0x8] sm:$0xff] %vm26, 0.0
    $region25: #{positionwise_ffn.1} parent=1 // pred_fallthru
      _
    %v29 = vld [vmem:[%s0] sm:$0xf]
    %v30 = vld [vmem:[%s0 + $0x4] sm:$0xf]
    %v31 = vld [vmem:[%s1] sm:$0xf]
    %v32 = vld [vmem:[%s1 + $0x4] sm:$0xf]
    %v33 = vld [vmem:[%s1 + $0x8] sm:$0xf]
    %v34 = vld [vmem:[%s1 + $0xc] sm:$0xf]
    %v35 = vld [vmem:[%s2] sm:$0x1]
    %v37 = vlaneseq
    %v38 = vshrl.u32 %v37, 7
    %v39 = vsub.s32 0, %v38
    %v40 = vrot.slane %v35, %v39
    %v44 = vunpack.c.l.b16 %v29
    %v45 = vunpack.c.l.b16 %v30
    %v46 = vpack.c.b16 %v45, %v44
    %v51 = vunpack.c.l.b16 %v31
    %v52 = vunpack.c.l.b16 %v32
    %v53 = vunpack.c.l.b16 %v33
    %v54 = vunpack.c.l.b16 %v34
    %v55 = vpack.c.b16 %v52, %v51
    %v56 = vpack.c.b16 %v54, %v53
    %vm59 = vcmask 261120
    %v61 = vsel %vm59, %v46, 0
    %63 = vmatprep.subr.bf16.mxu0 0
    %64 = vmatpush1.bf16.msra.mxu0 %v55
    %65 = vmatprep.subr.bf16.mxu0 0
    %66 = vmatpush1.bf16.msra.mxu0 %v56
    %67 = vmatprep.subr.bf16.mxu0 0
    %68 = vmatpush1.bf16.msra.mxu0 0
    %69 = vmatprep.subr.bf16.mxu0 0
    %70 = vmatpush1.bf16.msra.mxu0 0
    %71 = vmatprep.subr.bf16.mxu0 0
    %72 = vmatpush1.bf16.msra.mxu0 0
    %73 = vmatprep.subr.bf16.mxu0 0
    %74 = vmatpush1.bf16.msra.mxu0 0
    %75 = vmatprep.subr.bf16.mxu0 0
    %76 = vmatpush1.bf16.msra.mxu0 0
    %77 = vmatprep.subr.bf16.mxu0 0
    %78 = vmatpush1.bf16.msra.mxu0 0
    %79 = vmatprep.subr.bf16.mxu0 0
    %80 = vmatpush1.bf16.msra.mxu0 0
    %81 = vmatprep.subr.bf16.mxu0 0
    %82 = vmatpush1.bf16.msra.mxu0 0
    %83 = vmatprep.subr.bf16.mxu0 0
    %84 = vmatpush1.bf16.msra.mxu0 0
    %85 = vmatprep.subr.bf16.mxu0 0
    %86 = vmatpush1.bf16.msra.mxu0 0
    %87 = vmatprep.subr.bf16.mxu0 0
    %88 = vmatpush1.bf16.msra.mxu0 0
    %89 = vmatprep.subr.bf16.mxu0 0
    %90 = vmatpush1.bf16.msra.mxu0 0
    %91 = vmatprep.subr.bf16.mxu0 0
    %92 = vmatpush1.bf16.msra.mxu0 0
    %93 = vmatprep.subr.bf16.mxu0 0
    %94 = vmatpush1.bf16.msra.mxu0 0
    %95 = vmatprep.mubr.bf16.mxu0 0
    %96 = vmatmul.mubr.bf16.gmra.mrb[0].mxu0 %v61
    %v97 = vpop.f32.mrb[0].mxu0
    %v98 = vadd.f32 %v40, %v97
    %v99 = vpop.f32.mrb[0].mxu0
    %v100 = vpop.f32.mrb[0].mxu0
    %v101 = vadd.f32 %v40, %v100
    %v102 = vpop.f32.mrb[0].mxu0
    %103 = vdwg.mxu0
    %v104 = vmax.f32 %v98, 0.0
    %v105 = vmax.f32 %v101, 0.0
    %v106 = vld [vmem:[#allocation2] sm:$0xff]
    %v107 = vld [vmem:[#allocation2 + $0x8] sm:$0xff]
    %v108 = vpack.c.bf16 %v105, %v104
    %v109 = vld [vmem:[%s3] sm:$0xf]
    %v110 = vld [vmem:[%s3 + $0x4] sm:$0xf]
    %v111 = vld [vmem:[%s3 + $0x8] sm:$0xf]
    %v112 = vld [vmem:[%s3 + $0xc] sm:$0xf]
    %v113 = vld [vmem:[%s3 + $0x10] sm:$0xf]
    %v114 = vld [vmem:[%s3 + $0x14] sm:$0xf]
    %v115 = vld [vmem:[%s3 + $0x18] sm:$0xf]
    %v116 = vld [vmem:[%s3 + $0x1c] sm:$0xf]
    %v117 = vld [vmem:[%s3 + $0x20] sm:$0xf]
    %v118 = vld [vmem:[%s3 + $0x24] sm:$0xf]
    %v119 = vld [vmem:[%s3 + $0x28] sm:$0xf]
    %v120 = vld [vmem:[%s3 + $0x2c] sm:$0xf]
    %v121 = vld [vmem:[%s3 + $0x30] sm:$0xf]
    %v122 = vld [vmem:[%s3 + $0x34] sm:$0xf]
    %v123 = vld [vmem:[%s3 + $0x38] sm:$0xf]
    %v124 = vld [vmem:[%s3 + $0x3c] sm:$0xf]
    %v141 = vunpack.c.l.b16 %v109
    %v142 = vunpack.c.l.b16 %v110
    %v143 = vunpack.c.l.b16 %v111
    %v144 = vunpack.c.l.b16 %v112
    %v145 = vunpack.c.l.b16 %v113
    %v146 = vunpack.c.l.b16 %v114
    %v147 = vunpack.c.l.b16 %v115
    %v148 = vunpack.c.l.b16 %v116
    %v149 = vunpack.c.l.b16 %v117
    %v150 = vunpack.c.l.b16 %v118
    %v151 = vunpack.c.l.b16 %v119
    %v152 = vunpack.c.l.b16 %v120
    %v153 = vunpack.c.l.b16 %v121
    %v154 = vunpack.c.l.b16 %v122
    %v155 = vunpack.c.l.b16 %v123
    %v156 = vunpack.c.l.b16 %v124
    %v157 = vpack.c.b16 %v142, %v141
    %v158 = vpack.c.b16 %v144, %v143
    %v159 = vpack.c.b16 %v146, %v145
    %v160 = vpack.c.b16 %v148, %v147
    %v161 = vpack.c.b16 %v150, %v149
    %v162 = vpack.c.b16 %v152, %v151
    %v163 = vpack.c.b16 %v154, %v153
    %v164 = vpack.c.b16 %v156, %v155
    %173 = vmatprep.subr.bf16.mxu0 0
    %174 = vmatpush1.bf16.msra.mxu0 %v157
    %175 = vmatprep.subr.bf16.mxu0 0
    %176 = vmatpush1.bf16.msra.mxu0 %v158
    %177 = vmatprep.subr.bf16.mxu0 0
    %178 = vmatpush1.bf16.msra.mxu0 %v159
    %179 = vmatprep.subr.bf16.mxu0 0
    %180 = vmatpush1.bf16.msra.mxu0 %v160
    %181 = vmatprep.subr.bf16.mxu0 0
    %182 = vmatpush1.bf16.msra.mxu0 %v161
    %183 = vmatprep.subr.bf16.mxu0 0
    %184 = vmatpush1.bf16.msra.mxu0 %v162
    %185 = vmatprep.subr.bf16.mxu0 0
    %186 = vmatpush1.bf16.msra.mxu0 %v163
    %187 = vmatprep.subr.bf16.mxu0 0
    %188 = vmatpush1.bf16.msra.mxu0 %v164
    %189 = vmatprep.subr.bf16.mxu0 0
    %190 = vmatpush1.bf16.msra.mxu0 0
    %191 = vmatprep.subr.bf16.mxu0 0
    %192 = vmatpush1.bf16.msra.mxu0 0
    %193 = vmatprep.subr.bf16.mxu0 0
    %194 = vmatpush1.bf16.msra.mxu0 0
    %195 = vmatprep.subr.bf16.mxu0 0
    %196 = vmatpush1.bf16.msra.mxu0 0
    %197 = vmatprep.subr.bf16.mxu0 0
    %198 = vmatpush1.bf16.msra.mxu0 0
    %199 = vmatprep.subr.bf16.mxu0 0
    %200 = vmatpush1.bf16.msra.mxu0 0
    %201 = vmatprep.subr.bf16.mxu0 0
    %202 = vmatpush1.bf16.msra.mxu0 0
    %203 = vmatprep.subr.bf16.mxu0 0
    %204 = vmatpush1.bf16.msra.mxu0 0
    %205 = vmatprep.mubr.bf16.mxu0 0
    %206 = vmatmul.mubr.bf16.gmra.mrb[0].mxu0 %v108
    %v207 = vpop.f32.mrb[0].mxu0
    %v208 = vadd.f32 0.0, %v207
    %v209 = vpop.f32.mrb[0].mxu0
    %v210 = vpop.f32.mrb[0].mxu0
    %v211 = vadd.f32 0.0, %v210
    %v212 = vpop.f32.mrb[0].mxu0
    %213 = vdwg.mxu0
    %v214 = vadd.f32 %v106, %v208
    %v215 = vadd.f32 %v107, %v211
    %216 = vst.msk [vmem:[#allocation2] sm:$0xff] %vm59, %v214
    %217 = vst.msk [vmem:[#allocation2 + $0x8] sm:$0xff] %vm59, %v215
    // Predicated region
    $region26: #{positionwise_ffn.1} parent=1 // pred_check
      %p218 = pneg %p22
    $region27: #{positionwise_ffn.1} parent=1 // pred_check_branch
      %220 = sbr.rel (%p218) target = $region29
    $region28: #{positionwise_ffn.1} parent=1 // pred_region
      %v221 = vld [vmem:[#allocation2] sm:$0xff]
      %v222 = vld [vmem:[#allocation2 + $0x8] sm:$0xff]
      %v223 = vld [vmem:[%s4] sm:$0x1]
      %v225 = vlaneseq
      %v226 = vshrl.u32 %v225, 7
      %v227 = vsub.s32 0, %v226
      %v228 = vrot.slane %v223, %v227
      %v230 = vadd.f32 %v221, %v228
      %v231 = vadd.f32 %v222, %v228
      %232 = vst.msk [vmem:[#allocation3] sm:$0xff] %vm59, %v230
      %233 = vst.msk [vmem:[#allocation3 + $0x8] sm:$0xff] %vm59, %v231
    $region29: #{positionwise_ffn.1} parent=1 // pred_fallthru
      _
    // Predicated region
    $region30: #{positionwise_ffn.1} parent=1 // pred_check
      _
    $region31: #{positionwise_ffn.1} parent=1 // pred_check_branch
      %235 = sbr.rel (0) target = $region33
    $region32: #{positionwise_ffn.1} parent=1 // pred_region
      %s237 = ssub.s32 256, 256
      %238 = vsyncadd [#allocation4], %s237
      %s239 = sshll.u32 [#allocation3], 4
      %s240 = int_to_ptr.vmem [resolvable:$true] %s239
      %245 = dma.vmem_to_hbm [thread:$0]  %s240, 256, %s5, [#allocation4], 128, 128, 8
    $region33: #{positionwise_ffn.1} parent=1 // pred_fallthru
      _
    // Predicated region
    $region34: #{positionwise_ffn.1} parent=1 // pred_check
      _
    $region35: #{positionwise_ffn.1} parent=1 // pred_check_branch
      %247 = sbr.rel (0) target = $region37
    $region36: #{positionwise_ffn.1} parent=1 // pred_region
      %248 = dma.done [#allocation4], 256
    $region37: #{positionwise_ffn.1} parent=1 // pred_fallthru
      _
    %249 = vsyncpa [#allocation4], 1

</llo_original>
